<compile_context>
chip_gen: v7x
topology: tpu7x:2x2x1
jax: 0.10.0
libtpu: 0.0.40
codegen_flags: <defaults>
</compile_context>

<pallas_src>
import functools
import math

import jax
import jax.numpy as jnp
from jax.experimental import pallas as pl
from jax.experimental.pallas import tpu as pltpu


def _decomp_kernel(x_ref, *rest, kernel_size, g, m, with_res):
    """One (batch, L-tile) grid step of the fused moving-average / residual kernel (stride=1)."""
    if with_res:
        res_ref, mean_ref, xpad_ref, s_ref = rest
    else:
        mean_ref, xpad_ref, s_ref = rest
        res_ref = None

    L = x_ref.shape[1]
    C = x_ref.shape[2]
    lp = xpad_ref.shape[0]
    tl = mean_ref.shape[1]
    s_len = s_ref.shape[0]
    pad = (kernel_size - 1) // 2
    tail = lp - pad - L  # >= pad; also covers a partial last output tile

    lt = pl.program_id(1)

    # --- Build the replicate-padded f32 copy of this batch element once (first L-tile). ---
    # The input block's index map depends only on b, so x_ref stays resident (no re-DMA) and
    # xpad_ref stays valid for all later L-tiles of the same batch element (L-tile axis is
    # marked "arbitrary" so this carried state is legal).
    @pl.when(lt == 0)
    def _():
        xf = x_ref[0].astype(jnp.float32)                          # (L, C), cast once
        xpad_ref[pl.ds(pad, L), :] = xf
        if pad > 0:
            xpad_ref[pl.ds(0, pad), :] = jnp.broadcast_to(xf[0:1, :], (pad, C))
        if tail > 0:
            xpad_ref[pl.ds(pad + L, tail), :] = jnp.broadcast_to(xf[L - 1:L, :], (tail, C))

    o0 = lt * tl                                                   # first output row of this tile
    if tl % 8 == 0:
        o0 = pl.multiple_of(o0, 8)

    # --- Stage 1: g-tap group sums  S[u] = sum_{d<g} xpad[o0 + u + d]. ---
    acc_s = xpad_ref[pl.ds(o0, s_len), :]
    for d in range(1, g):
        acc_s = acc_s + xpad_ref[pl.ds(o0 + d, s_len), :]
    s_ref[...] = acc_s

    # --- Stage 2: combine m group sums (+ remainder taps) into the k-tap window sum. ---
    acc = s_ref[pl.ds(0, tl), :]
    for i in range(1, m):
        acc = acc + s_ref[pl.ds(i * g, tl), :]
    for d in range(g * m, kernel_size):                            # r = k - g*m leftover taps
        acc = acc + xpad_ref[pl.ds(o0 + d, tl), :]

    mean = acc * (1.0 / kernel_size)
    mean_ref[0] = mean.astype(mean_ref.dtype)
    if with_res:
        xt = xpad_ref[pl.ds(o0 + pad, tl), :]                      # == x[b, o0:o0+tl, :] in f32
        res_ref[0] = (xt - mean).astype(res_ref.dtype)


def _decomp_pallas(x, kernel_size, *, with_res, tile_l=None):
    assert x.ndim == 3, "expected (B, L, C)"
    assert kernel_size % 2 == 1, "fused path assumes odd kernel_size (LPPIEA uses 25)"
    B, L, C = x.shape
    l_out = L  # stride=1, odd kernel -> output length == L

    # L-tile size: big enough to amortise per-step overhead; multiple of 8 when actually tiling.
    if tile_l is None:
        tl = l_out if l_out <= 512 else 512
    else:
        tl = min(tile_l, l_out)
    if tl < l_out:
        tl = max(8, (tl // 8) * 8)
    n_lt = pl.cdiv(l_out, tl)

    lp_alloc = n_lt * tl + kernel_size - 1   # padded scratch rows (covers a partial last tile)
    g = max(1, int(math.ceil(math.sqrt(kernel_size))))
    m = kernel_size // g
    s_len = tl + (m - 1) * g

    kernel = functools.partial(
        _decomp_kernel, kernel_size=kernel_size, g=g, m=m, with_res=with_res)

    tile_spec = pl.BlockSpec((1, tl, C), lambda b, t: (b, t, 0))
    out_sds = jax.ShapeDtypeStruct((B, l_out, C), x.dtype)
    if with_res:
        out_shape = (out_sds, out_sds)       # (res, moving_mean) -- PyTorch return order
        out_specs = [tile_spec, tile_spec]
    else:
        out_shape = out_sds
        out_specs = tile_spec

    n_out = 2 if with_res else 1
    itemsize = x.dtype.itemsize
    # Rough per-step VMEM: double-buffered resident input block + output tiles + f32 scratch.
    vmem_need = (2 * L * C + 2 * n_out * tl * C) * itemsize + (lp_alloc + s_len) * C * 4
    params = {"dimension_semantics": ("parallel", "arbitrary")}
    if vmem_need > 24 * 1024 * 1024:
        # Long sequences: raise the scoped-VMEM budget, staying under v7x's 64 MiB physical VMEM.
        params["vmem_limit_bytes"] = int(min(vmem_need * 3 // 2, 60 * 1024 * 1024))

    cost = pl.CostEstimate(
        flops=int(B) * int(l_out) * int(C) * (kernel_size + 2),
        transcendentals=0,
        bytes_accessed=int((1 + n_out) * B * l_out * C * itemsize),
    )

    return pl.pallas_call(
        kernel,
        out_shape=out_shape,
        grid_spec=pltpu.PrefetchScalarGridSpec(
            num_scalar_prefetch=0,
            grid=(B, n_lt),
            in_specs=[pl.BlockSpec((1, L, C), lambda b, t: (b, 0, 0))],
            out_specs=out_specs,
            scratch_shapes=[
                pltpu.VMEM((lp_alloc, C), jnp.float32),   # replicate-padded batch element
                pltpu.VMEM((s_len, C), jnp.float32),      # stage-1 group sums
            ],
        ),
        compiler_params=pltpu.CompilerParams(**params),
        cost_estimate=cost,
    )(x)


def series_decomp(x, kernel_size, tile_l=None):
    """Pallas equivalent of series_decomp.forward(): returns (res, moving_mean)."""
    return _decomp_pallas(x, kernel_size, with_res=True, tile_l=tile_l)


def moving_avg(x, kernel_size, stride=1, tile_l=None):
    """Pallas equivalent of moving_avg.forward(). The Model only ever uses stride=1, k=25."""
    if stride == 1 and kernel_size % 2 == 1:
        return _decomp_pallas(x, kernel_size, with_res=False, tile_l=tile_l)
    # TODO(synk): general-stride / even-kernel AvgPool1d is unused by the Model; plain-JAX fallback.
    return _moving_avg_ref(x, kernel_size, stride)


def _moving_avg_ref(x, kernel_size, stride):
    """Pure-JAX reference mirroring the PyTorch moving_avg module."""
    pad = (kernel_size - 1) // 2
    front = jnp.repeat(x[:, 0:1, :], pad, axis=1)
    end = jnp.repeat(x[:, -1:, :], pad, axis=1)
    xp = jnp.concatenate([front, x, end], axis=1)
    l_out = (xp.shape[1] - kernel_size) // stride + 1
    outs = [jnp.mean(xp[:, t * stride:t * stride + kernel_size, :], axis=1) for t in range(l_out)]
    return jnp.stack(outs, axis=1)


if __name__ == "__main__":
    # Small shapes consistent with the module: (batch, seq_len, enc_in), kernel_size=25 as in Model.
    B, L, C = 2, 96, 8
    kernel_size = 25

    key = jax.random.PRNGKey(0)
    x = jax.random.normal(key, (B, L, C), dtype=jnp.float32)

    # Fused decomposition (multi-tile path: 3 L-tiles of 32 rows per batch element).
    res, mean = series_decomp(x, kernel_size, tile_l=32)
    res, mean = jax.block_until_ready((res, mean))

    mean_ref = _moving_avg_ref(x, kernel_size, stride=1)
    res_ref = x - mean_ref
    assert mean.shape == mean_ref.shape, (mean.shape, mean_ref.shape)
    assert jnp.allclose(mean, mean_ref, atol=1e-4, rtol=1e-4), "moving_mean mismatch vs reference"
    assert jnp.allclose(res, res_ref, atol=1e-4, rtol=1e-4), "residual mismatch vs reference"

    # Mean-only path (single-tile, default tiling).
    mean2 = jax.block_until_ready(moving_avg(x, kernel_size, stride=1))
    assert jnp.allclose(mean2, mean_ref, atol=1e-4, rtol=1e-4), "moving_avg mismatch vs reference"

    print("KERNEL_OK")
</pallas_src>

<mosaic_0001>
module attributes {stable_mosaic.version = 11 : i64} {
  func.func @_decomp_kernel(%arg0: i32, %arg1: i32, %arg2: memref<1x96x8xf32, #tpu.memory_space<vmem>>, %arg3: memref<1x32x8xf32, #tpu.memory_space<vmem>>, %arg4: memref<1x32x8xf32, #tpu.memory_space<vmem>>, %arg5: memref<120x8xf32, #tpu.memory_space<vmem>>, %arg6: memref<52x8xf32, #tpu.memory_space<vmem>>) attributes {dimension_semantics = [#tpu.dimension_semantics<parallel>, #tpu.dimension_semantics<arbitrary>], iteration_bounds = array<i64: 2, 3>, scalar_prefetch = 0 : i64, scratch_operands = 2 : i64, tpu.core_type = #tpu.core_type<tc>, window_params = [{transform_indices = @transform_0, window_bounds = array<i64: 1, 96, 8>}, {transform_indices = @transform_1, window_bounds = array<i64: 1, 32, 8>}, {transform_indices = @transform_2, window_bounds = array<i64: 1, 32, 8>}]} {
    %c0_i32 = arith.constant 0 : i32
    %0 = arith.cmpi eq, %arg1, %c0_i32 : i32
    %1 = arith.extui %0 : i1 to i32
    %c0_i32_0 = arith.constant 0 : i32
    %2 = arith.cmpi ne, %1, %c0_i32_0 : i32
    scf.if %2 {
      %c0_20 = arith.constant 0 : index
      %c0_21 = arith.constant 0 : index
      %c0_22 = arith.constant 0 : index
      %45 = vector.load %arg2[%c0_20, %c0_21, %c0_22] : memref<1x96x8xf32, #tpu.memory_space<vmem>>, vector<1x96x8xf32>
      %46 = vector.shape_cast %45 : vector<1x96x8xf32> to vector<96x8xf32>
      %c12 = arith.constant 12 : index
      %c0_23 = arith.constant 0 : index
      %47 = vector.load %arg5[%c12, %c0_23] : memref<120x8xf32, #tpu.memory_space<vmem>>, vector<96x8xf32>
      tpu.vector_store %arg5[%c12, %c0_23], %46 {strides = array<i32>} : memref<120x8xf32, #tpu.memory_space<vmem>>, vector<96x8xf32>,
      %48 = vector.extract_strided_slice %46 {offsets = [0, 0], sizes = [1, 8], strides = [1, 1]} : vector<96x8xf32> to vector<1x8xf32>
      %49 = vector.shape_cast %48 : vector<1x8xf32> to vector<1x8xf32>
      %50 = vector.broadcast %49 : vector<1x8xf32> to vector<12x8xf32>
      %c0_24 = arith.constant 0 : index
      %c0_25 = arith.constant 0 : index
      %51 = vector.load %arg5[%c0_24, %c0_25] : memref<120x8xf32, #tpu.memory_space<vmem>>, vector<12x8xf32>
      tpu.vector_store %arg5[%c0_24, %c0_25], %50 {strides = array<i32>} : memref<120x8xf32, #tpu.memory_space<vmem>>, vector<12x8xf32>,
      %52 = vector.extract_strided_slice %46 {offsets = [95, 0], sizes = [1, 8], strides = [1, 1]} : vector<96x8xf32> to vector<1x8xf32>
      %53 = vector.shape_cast %52 : vector<1x8xf32> to vector<1x8xf32>
      %54 = vector.broadcast %53 : vector<1x8xf32> to vector<12x8xf32>
      %c108 = arith.constant 108 : index
      %c0_26 = arith.constant 0 : index
      %55 = vector.load %arg5[%c108, %c0_26] : memref<120x8xf32, #tpu.memory_space<vmem>>, vector<12x8xf32>
      tpu.vector_store %arg5[%c108, %c0_26], %54 {strides = array<i32>} : memref<120x8xf32, #tpu.memory_space<vmem>>, vector<12x8xf32>,
    } else {
    }
    %c32_i32 = arith.constant 32 : i32
    %3 = arith.muli %arg1, %c32_i32 : i32
    %4 = tpu.assume_multiple %3, 8 : i32
    %5 = arith.index_cast %4 : i32 to index
    %c0 = arith.constant 0 : index
    %6 = vector.load %arg5[%5, %c0] : memref<120x8xf32, #tpu.memory_space<vmem>>, vector<52x8xf32>
    %c1_i32 = arith.constant 1 : i32
    %7 = arith.addi %4, %c1_i32 : i32
    %8 = arith.index_cast %7 : i32 to index
    %c0_1 = arith.constant 0 : index
    %9 = vector.load %arg5[%8, %c0_1] : memref<120x8xf32, #tpu.memory_space<vmem>>, vector<52x8xf32>
    %10 = arith.addf %6, %9 : vector<52x8xf32>
    %c2_i32 = arith.constant 2 : i32
    %11 = arith.addi %4, %c2_i32 : i32
    %12 = arith.index_cast %11 : i32 to index
    %c0_2 = arith.constant 0 : index
    %13 = vector.load %arg5[%12, %c0_2] : memref<120x8xf32, #tpu.memory_space<vmem>>, vector<52x8xf32>
    %14 = arith.addf %10, %13 : vector<52x8xf32>
    %c3_i32 = arith.constant 3 : i32
    %15 = arith.addi %4, %c3_i32 : i32
    %16 = arith.index_cast %15 : i32 to index
    %c0_3 = arith.constant 0 : index
    %17 = vector.load %arg5[%16, %c0_3] : memref<120x8xf32, #tpu.memory_space<vmem>>, vector<52x8xf32>
    %18 = arith.addf %14, %17 : vector<52x8xf32>
    %c4_i32 = arith.constant 4 : i32
    %19 = arith.addi %4, %c4_i32 : i32
    %20 = arith.index_cast %19 : i32 to index
    %c0_4 = arith.constant 0 : index
    %21 = vector.load %arg5[%20, %c0_4] : memref<120x8xf32, #tpu.memory_space<vmem>>, vector<52x8xf32>
    %22 = arith.addf %18, %21 : vector<52x8xf32>
    %c0_5 = arith.constant 0 : index
    %c0_6 = arith.constant 0 : index
    %23 = vector.load %arg6[%c0_5, %c0_6] : memref<52x8xf32, #tpu.memory_space<vmem>>, vector<52x8xf32>
    tpu.vector_store %arg6[%c0_5, %c0_6], %22 {strides = array<i32>} : memref<52x8xf32, #tpu.memory_space<vmem>>, vector<52x8xf32>,
    %c0_7 = arith.constant 0 : index
    %c0_8 = arith.constant 0 : index
    %24 = vector.load %arg6[%c0_7, %c0_8] : memref<52x8xf32, #tpu.memory_space<vmem>>, vector<32x8xf32>
    %c5 = arith.constant 5 : index
    %c0_9 = arith.constant 0 : index
    %25 = vector.load %arg6[%c5, %c0_9] : memref<52x8xf32, #tpu.memory_space<vmem>>, vector<32x8xf32>
    %26 = arith.addf %24, %25 : vector<32x8xf32>
    %c10 = arith.constant 10 : index
    %c0_10 = arith.constant 0 : index
    %27 = vector.load %arg6[%c10, %c0_10] : memref<52x8xf32, #tpu.memory_space<vmem>>, vector<32x8xf32>
    %28 = arith.addf %26, %27 : vector<32x8xf32>
    %c15 = arith.constant 15 : index
    %c0_11 = arith.constant 0 : index
    %29 = vector.load %arg6[%c15, %c0_11] : memref<52x8xf32, #tpu.memory_space<vmem>>, vector<32x8xf32>
    %30 = arith.addf %28, %29 : vector<32x8xf32>
    %c20 = arith.constant 20 : index
    %c0_12 = arith.constant 0 : index
    %31 = vector.load %arg6[%c20, %c0_12] : memref<52x8xf32, #tpu.memory_space<vmem>>, vector<32x8xf32>
    %32 = arith.addf %30, %31 : vector<32x8xf32>
    %cst = arith.constant 4.000000e-02 : f32
    %33 = vector.broadcast %cst : f32 to vector<32x8xf32>
    %34 = arith.mulf %32, %33 : vector<32x8xf32>
    %c0_13 = arith.constant 0 : index
    %c0_14 = arith.constant 0 : index
    %c0_15 = arith.constant 0 : index
    %35 = vector.load %arg4[%c0_13, %c0_14, %c0_15] : memref<1x32x8xf32, #tpu.memory_space<vmem>>, vector<1x32x8xf32>
    %36 = vector.shape_cast %35 : vector<1x32x8xf32> to vector<32x8xf32>
    %37 = vector.shape_cast %34 : vector<32x8xf32> to vector<1x32x8xf32>
    tpu.vector_store %arg4[%c0_13, %c0_14, %c0_15], %37 {strides = array<i32>} : memref<1x32x8xf32, #tpu.memory_space<vmem>>, vector<1x32x8xf32>,
    %c12_i32 = arith.constant 12 : i32
    %38 = arith.addi %4, %c12_i32 : i32
    %39 = arith.index_cast %38 : i32 to index
    %c0_16 = arith.constant 0 : index
    %40 = vector.load %arg5[%39, %c0_16] : memref<120x8xf32, #tpu.memory_space<vmem>>, vector<32x8xf32>
    %41 = arith.subf %40, %34 : vector<32x8xf32>
    %c0_17 = arith.constant 0 : index
    %c0_18 = arith.constant 0 : index
    %c0_19 = arith.constant 0 : index
    %42 = vector.load %arg3[%c0_17, %c0_18, %c0_19] : memref<1x32x8xf32, #tpu.memory_space<vmem>>, vector<1x32x8xf32>
    %43 = vector.shape_cast %42 : vector<1x32x8xf32> to vector<32x8xf32>
    %44 = vector.shape_cast %41 : vector<32x8xf32> to vector<1x32x8xf32>
    tpu.vector_store %arg3[%c0_17, %c0_18, %c0_19], %44 {strides = array<i32>} : memref<1x32x8xf32, #tpu.memory_space<vmem>>, vector<1x32x8xf32>,
    return
  }
  func.func @transform_0(%arg0: i32, %arg1: i32) -> (i32, i32, i32) {
    %c0_i32 = arith.constant 0 : i32
    %c0_i32_0 = arith.constant 0 : i32
    %c0_i32_1 = arith.constant 0 : i32
    return %arg0, %c0_i32, %c0_i32_0 : i32, i32, i32
  }
  func.func @transform_1(%arg0: i32, %arg1: i32) -> (i32, i32, i32) {
    %c0_i32 = arith.constant 0 : i32
    %c0_i32_0 = arith.constant 0 : i32
    return %arg0, %arg1, %c0_i32 : i32, i32, i32
  }
  func.func @transform_2(%arg0: i32, %arg1: i32) -> (i32, i32, i32) {
    %c0_i32 = arith.constant 0 : i32
    %c0_i32_0 = arith.constant 0 : i32
    return %arg0, %arg1, %c0_i32 : i32, i32, i32
  }
}

</mosaic_0001>

<llo_original>
// kernel: tpu_custom_call.1
$region0: #{tpu_custom_call.1}
  #allocation0 [shape = 'u32[]', space=smem, size = 0x4, offset = 0x4, fixed_abs, tag = 'smem constant byte address 0x4 - core index']
  #allocation1 [shape = 'u32[144,128]{1,0:T(1,128)}', space=vmem, size = 0x12000, scoped, tag = 'internal scratch']
  #allocation2 [shape = 'f32[120,8]{1,0:T(8,128)}', space=vmem, size = 0xf000, scoped, tag = 'scratch operand']
  #allocation3 [shape = 'f32[52,8]{1,0:T(8,128)}', space=vmem, size = 0x7000, scoped, tag = 'scratch operand']
  %s0 = inlined_call_operand.vmem [shape: f32[2,96,8], index: 0, kind: input, shape index: {}]
  %s1 = inlined_call_operand.vmem [shape: f32[2,96,8], index: 1, kind: output, shape index: {0}]
  %s2 = inlined_call_operand.vmem [shape: f32[2,96,8], index: 2, kind: output, shape index: {1}]
  %3 = xla_tuple %s1, %s2
  %s4 = sld [smem:[#allocation0]]
  $region49: #{tpu_custom_call.1} parent=0
    _
  %s6 = ssub.s32 1, %s4
  %s7 = scalar_select 0, %s6, %s4
  loop: start=0, step=1, limit=8
  $region2: #{tpu_custom_call.1} parent=0 // loop_pre_header
    _
  $region3: #{tpu_custom_call.1} parent=0 // loop_header
    %s9 = sphi 0, %s13
    %p10 = scmp.ge.s32.totalorder %s9, 8
    %s16 = sphi 0, %s28
    %s17 = sphi 0, %s24
    %s18 = sphi 0, %s16
    %s19 = sphi 0, %s17
    %s20 = sphi 0, %s18
    %s21 = sphi 0, %s19
    %s31 = sphi 0, %s33
    %s34 = sphi 0, %s31
    %s35 = sphi 0, %s34
    %s51 = sphi 0, %s35
    %s59 = sphi 0, %s61
    %s62 = sphi 0, %s59
    %s63 = sphi 0, %s62
    %s79 = sphi 0, %s63
    %s87 = sphi 0, %s89
    %s90 = sphi 0, %s87
    %s91 = sphi 0, %s90
    %s107 = sphi 0, %s91
  $region4: #{tpu_custom_call.1} parent=0 // loop_header_branch
    %12 = sbr.rel (%p10) target = $region8
  $region5: #{tpu_custom_call.1} parent=0 // loop_body
    %s14 = ssub.s32 %s9, 1
    %s15 = ssub.s32 %s9, 2
    %s22 = sadd.s32 1, %s17
    %p23 = scmp.ge.s32.totalorder %s22, 3
    %s24 = scalar_select %p23, 0, %s22
    %s25 = sadd.s32 1, %s16
    %s26 = scalar_select %p23, %s25, %s16
    %p27 = scmp.ge.s32.totalorder %s26, 2
    %s28 = scalar_select %p27, 0, %s26
    %s29 = ssub.s32 %s16, %s28
    %p30 = scmp.eq.s32.totalorder %s29, 0
    %s32 = sadd.s32 %s31, 1
    %s33 = scalar_select %p30, %s31, %s32
    %p36 = pneg %p30
    %p37 = scmp.eq.s32.totalorder %s9, 5
    %p38 = por %p36, %p37
    %p39 = scmp.ne.s32.totalorder %s31, %s34
    %p40 = scmp.eq.s32.totalorder %s9, 0
    %p41 = por %p39, %p40
    %p42 = scmp.ne.s32.totalorder %s31, %s34
    %p43 = scmp.eq.s32.totalorder %s14, 5
    %p44 = por %p42, %p43
    %p45 = scmp.ne.s32.totalorder %s34, %s35
    %p46 = scmp.eq.s32.totalorder %s14, 0
    %p47 = por %p45, %p46
    %p48 = scmp.ne.s32.totalorder %s34, %s35
    %p49 = scmp.eq.s32.totalorder %s15, 5
    %p50 = por %p48, %p49
    %p52 = scmp.ne.s32.totalorder %s35, %s51
    %p53 = scmp.eq.s32.totalorder %s15, 0
    %p54 = por %p52, %p53
    %s55 = ssub.s32 %s16, %s28
    %s56 = ssub.s32 %s17, %s24
    %s57 = sor.u32 %s55, %s56
    %p58 = scmp.eq.s32.totalorder %s57, 0
    %s60 = sadd.s32 %s59, 1
    %s61 = scalar_select %p58, %s59, %s60
    %p64 = pneg %p58
    %p65 = scmp.eq.s32.totalorder %s9, 5
    %p66 = por %p64, %p65
    %p67 = scmp.ne.s32.totalorder %s59, %s62
    %p68 = scmp.eq.s32.totalorder %s9, 0
    %p69 = por %p67, %p68
    %p70 = scmp.ne.s32.totalorder %s59, %s62
    %p71 = scmp.eq.s32.totalorder %s14, 5
    %p72 = por %p70, %p71
    %p73 = scmp.ne.s32.totalorder %s62, %s63
    %p74 = scmp.eq.s32.totalorder %s14, 0
    %p75 = por %p73, %p74
    %p76 = scmp.ne.s32.totalorder %s62, %s63
    %p77 = scmp.eq.s32.totalorder %s15, 5
    %p78 = por %p76, %p77
    %p80 = scmp.ne.s32.totalorder %s63, %s79
    %p81 = scmp.eq.s32.totalorder %s15, 0
    %p82 = por %p80, %p81
    %s83 = ssub.s32 %s16, %s28
    %s84 = ssub.s32 %s17, %s24
    %s85 = sor.u32 %s83, %s84
    %p86 = scmp.eq.s32.totalorder %s85, 0
    %s88 = sadd.s32 %s87, 1
    %s89 = scalar_select %p86, %s87, %s88
    %p92 = pneg %p86
    %p93 = scmp.eq.s32.totalorder %s9, 5
    %p94 = por %p92, %p93
    %p95 = scmp.ne.s32.totalorder %s87, %s90
    %p96 = scmp.eq.s32.totalorder %s9, 0
    %p97 = por %p95, %p96
    %p98 = scmp.ne.s32.totalorder %s87, %s90
    %p99 = scmp.eq.s32.totalorder %s14, 5
    %p100 = por %p98, %p99
    %p101 = scmp.ne.s32.totalorder %s90, %s91
    %p102 = scmp.eq.s32.totalorder %s14, 0
    %p103 = por %p101, %p102
    %p104 = scmp.ne.s32.totalorder %s90, %s91
    %p105 = scmp.eq.s32.totalorder %s15, 5
    %p106 = por %p104, %p105
    %p108 = scmp.ne.s32.totalorder %s91, %s107
    %p109 = scmp.eq.s32.totalorder %s15, 0
    %p110 = por %p108, %p109
    %p111 = scmp.le.s32.totalorder 1, %s9
    %p112 = scmp.lt.s32.totalorder %s9, 7
    %p113 = pnand %p111, %p112
    %p114 = pneg %p113
    // Predicated region
    $region9: #{tpu_custom_call.1} parent=5 // pred_check
      _
    $region10: #{tpu_custom_call.1} parent=5 // pred_check_branch
      %116 = sbr.rel (%p113) target = $region12
    $region11: #{tpu_custom_call.1} parent=5 // pred_region
      %s117 = ssub.s32 %s9, 1
    $region12: #{tpu_custom_call.1} parent=5 // pred_fallthru
      _
    %p118 = scmp.lt.s32.totalorder %s9, 6
    // Predicated region
    $region13: #{tpu_custom_call.1} parent=5 // pred_check
      %p119 = pneg %p118
    $region14: #{tpu_custom_call.1} parent=5 // pred_check_branch
      %121 = sbr.rel (%p119) target = $region16
    $region15: #{tpu_custom_call.1} parent=5 // pred_region
      // Predicated region
      $region17: #{tpu_custom_call.1} parent=15 // pred_check
        %p122 = pneg %p41
      $region18: #{tpu_custom_call.1} parent=15 // pred_check_branch
        %124 = sbr.rel (%p122) target = $region20
      $region19: #{tpu_custom_call.1} parent=15 // pred_region
        %p125 = scmp.lt.s32.totalorder %s16, 1
        %s126 = scalar_select %p125, %s16, 1
        %s127 = smul.addr %s126, 12
        %s128 = smul.addr %s127, 8
        %s129 = scalar_lea.vmem %s0, %s128
      $region20: #{tpu_custom_call.1} parent=15 // pred_fallthru
        _
    $region16: #{tpu_custom_call.1} parent=5 // pred_fallthru
      _
    %p130 = scmp.le.s32.totalorder 1, %s9
    %p131 = scmp.lt.s32.totalorder %s9, 7
    %p132 = pnand %p130, %p131
    %p133 = pneg %p132
    // Predicated region
    $region21: #{tpu_custom_call.1} parent=5 // pred_check
      _
    $region22: #{tpu_custom_call.1} parent=5 // pred_check_branch
      %135 = sbr.rel (%p132) target = $region24
    $region23: #{tpu_custom_call.1} parent=5 // pred_region
      %s136 = ssub.s32 %s9, 1
      %p137 = scmp.lt.s32.totalorder %s18, 1
      %s138 = scalar_select %p137, %s18, 1
      %s139 = smul.addr %s138, 12
      %s140 = smul.addr %s139, 8
      %s141 = scalar_lea.vmem %s0, %s140
      %p142 = pneg %p47
      %p143 = pneg %p44
      %p144 = pneg %p75
      %p145 = pneg %p72
      %s146 = smul.u32 4, %s19
      %p147 = scmp.lt.s32.totalorder %s18, 1
      %s148 = scalar_select %p147, %s18, 1
      %p149 = scmp.lt.s32.totalorder %s146, 11
      %s150 = scalar_select %p149, %s146, 11
      %s151 = smul.addr %s148, 12
      %s152 = sadd.s32 %s150, %s151
      %s153 = smul.addr %s152, 8
      %s154 = scalar_lea.vmem %s1, %s153
      %p155 = pneg %p103
      %p156 = pneg %p100
      %s157 = smul.u32 4, %s19
      %p158 = scmp.lt.s32.totalorder %s18, 1
      %s159 = scalar_select %p158, %s18, 1
      %p160 = scmp.lt.s32.totalorder %s157, 11
      %s161 = scalar_select %p160, %s157, 11
      %s162 = smul.addr %s159, 12
      %s163 = sadd.s32 %s161, %s162
      %s164 = smul.addr %s163, 8
      %s165 = scalar_lea.vmem %s2, %s164
      %p166 = scmp.lt.s32.totalorder %s18, 1
      %s167 = scalar_select %p166, %s18, 1
      %s168 = smul.addr %s167, 12
      %s169 = smul.addr %s168, 8
      %s170 = scalar_lea.vmem %s0, %s169
      %s171 = smul.u32 4, %s19
      %p172 = scmp.lt.s32.totalorder %s18, 1
      %s173 = scalar_select %p172, %s18, 1
      %p174 = scmp.lt.s32.totalorder %s171, 11
      %s175 = scalar_select %p174, %s171, 11
      %s176 = smul.addr %s173, 12
      %s177 = sadd.s32 %s175, %s176
      %s178 = smul.addr %s177, 8
      %s179 = scalar_lea.vmem %s1, %s178
      %s180 = smul.u32 4, %s19
      %s181 = smul.u32 4, %s19
      %p182 = scmp.lt.s32.totalorder %s18, 1
      %s183 = scalar_select %p182, %s18, 1
      %p184 = scmp.lt.s32.totalorder %s181, 11
      %s185 = scalar_select %p184, %s181, 11
      %s186 = smul.addr %s183, 12
      %s187 = sadd.s32 %s185, %s186
      %s188 = smul.addr %s187, 8
      %s189 = scalar_lea.vmem %s2, %s188
      %s190 = smul.u32 4, %s19
      %p191 = scmp.eq.s32.totalorder %s19, 0
      // Predicated region
      $region25: #{tpu_custom_call.1} parent=23 // pred_check
        %p192 = pneg %p191
      $region26: #{tpu_custom_call.1} parent=23 // pred_check_branch
        %194 = sbr.rel (%p192) target = $region28
      $region27: #{tpu_custom_call.1} parent=23 // pred_region
        %v195 = vld [vmem:[%s170] sm:$0xff]
        %v196 = vld [vmem:[%s170 + $0x8] sm:$0xff]
        %v197 = vld [vmem:[%s170 + $0x10] sm:$0xff]
        %v198 = vld [vmem:[%s170 + $0x18] sm:$0xff]
        %v199 = vld [vmem:[%s170 + $0x20] sm:$0xff]
        %v200 = vld [vmem:[%s170 + $0x28] sm:$0xff]
        %v201 = vld [vmem:[%s170 + $0x30] sm:$0xff]
        %v202 = vld [vmem:[%s170 + $0x38] sm:$0xff]
        %v203 = vld [vmem:[%s170 + $0x40] sm:$0xff]
        %v204 = vld [vmem:[%s170 + $0x48] sm:$0xff]
        %v205 = vld [vmem:[%s170 + $0x50] sm:$0xff]
        %v206 = vld [vmem:[%s170 + $0x58] sm:$0xff]
        %vm207 = vcmask 64512
        %208 = vst.msk [vmem:[#allocation2 + $0xc] sm:$0xff] %vm207, %v195
        %209 = vst.msk [vmem:[#allocation2 + $0x14] sm:$0xff] %vm207, %v196
        %210 = vst.msk [vmem:[#allocation2 + $0x1c] sm:$0xff] %vm207, %v197
        %211 = vst.msk [vmem:[#allocation2 + $0x24] sm:$0xff] %vm207, %v198
        %212 = vst.msk [vmem:[#allocation2 + $0x2c] sm:$0xff] %vm207, %v199
        %213 = vst.msk [vmem:[#allocation2 + $0x34] sm:$0xff] %vm207, %v200
        %214 = vst.msk [vmem:[#allocation2 + $0x3c] sm:$0xff] %vm207, %v201
        %215 = vst.msk [vmem:[#allocation2 + $0x44] sm:$0xff] %vm207, %v202
        %216 = vst.msk [vmem:[#allocation2 + $0x4c] sm:$0xff] %vm207, %v203
        %217 = vst.msk [vmem:[#allocation2 + $0x54] sm:$0xff] %vm207, %v204
        %218 = vst.msk [vmem:[#allocation2 + $0x5c] sm:$0xff] %vm207, %v205
        %219 = vst.msk [vmem:[#allocation2 + $0x64] sm:$0xff] %vm207, %v206
        %v220 = vlaneseq
        %v221 = vshrl.u32 %v220, 7
        %v222 = vsub.s32 0, %v221
        %v223 = vrot.slane %v195, %v222
        %224 = vst.msk [vmem:[#allocation2] sm:$0xff] %vm207, %v223
        %vm225 = vcmask 60416
        %226 = vst.msk [vmem:[#allocation2 + $0x8] sm:$0xf] %vm225, %v223
        %v227 = vlaneseq
        %v228 = vshrl.u32 %v227, 7
        %v229 = vsub.s32 7, %v228
        %v230 = vrot.slane %v206, %v229
        %231 = vst.msk [vmem:[#allocation2 + $0x6c] sm:$0xff] %vm207, %v230
        %232 = vst.msk [vmem:[#allocation2 + $0x74] sm:$0xf] %vm225, %v230
      $region28: #{tpu_custom_call.1} parent=23 // pred_fallthru
        _
      %s233 = smul.u32 %s19, 32
      %s234 = scalar_lea.vmem [#allocation2], %s233
      %v235 = vld [vmem:[%s234] sm:$0xff]
      %v236 = vld [vmem:[%s234 + $0x8] sm:$0xff]
      %v237 = vld [vmem:[%s234 + $0x10] sm:$0xff]
      %v238 = vld [vmem:[%s234 + $0x18] sm:$0xff]
      %v239 = vld [vmem:[%s234 + $0x20] sm:$0xff]
      %v240 = vld [vmem:[%s234 + $0x28] sm:$0xff]
      %v241 = vld [vmem:[%s234 + $0x30] sm:$0xf]
      %s242 = sadd.s32 %s233, 1
      %s243 = scalar_lea.vmem [#allocation2], %s242
      %v244 = vld [vmem:[%s243] sm:$0xff]
      %v245 = vld [vmem:[%s243 + $0x8] sm:$0xff]
      %v246 = vld [vmem:[%s243 + $0x10] sm:$0xff]
      %v247 = vld [vmem:[%s243 + $0x18] sm:$0xff]
      %v248 = vld [vmem:[%s243 + $0x20] sm:$0xff]
      %v249 = vld [vmem:[%s243 + $0x28] sm:$0xff]
      %v250 = vld [vmem:[%s243 + $0x30] sm:$0xf]
      %v251 = vadd.f32 %v235, %v244
      %v252 = vadd.f32 %v236, %v245
      %v253 = vadd.f32 %v237, %v246
      %v254 = vadd.f32 %v238, %v247
      %v255 = vadd.f32 %v239, %v248
      %v256 = vadd.f32 %v240, %v249
      %v257 = vadd.f32 %v241, %v250
      %s258 = sadd.s32 %s233, 2
      %s259 = scalar_lea.vmem [#allocation2], %s258
      %v260 = vld [vmem:[%s259] sm:$0xff]
      %v261 = vld [vmem:[%s259 + $0x8] sm:$0xff]
      %v262 = vld [vmem:[%s259 + $0x10] sm:$0xff]
      %v263 = vld [vmem:[%s259 + $0x18] sm:$0xff]
      %v264 = vld [vmem:[%s259 + $0x20] sm:$0xff]
      %v265 = vld [vmem:[%s259 + $0x28] sm:$0xff]
      %v266 = vld [vmem:[%s259 + $0x30] sm:$0xf]
      %v267 = vadd.f32 %v251, %v260
      %v268 = vadd.f32 %v252, %v261
      %v269 = vadd.f32 %v253, %v262
      %v270 = vadd.f32 %v254, %v263
      %v271 = vadd.f32 %v255, %v264
      %v272 = vadd.f32 %v256, %v265
      %v273 = vadd.f32 %v257, %v266
      %s274 = sadd.s32 %s233, 3
      %s275 = scalar_lea.vmem [#allocation2], %s274
      %v276 = vld [vmem:[%s275] sm:$0xff]
      %v277 = vld [vmem:[%s275 + $0x8] sm:$0xff]
      %v278 = vld [vmem:[%s275 + $0x10] sm:$0xff]
      %v279 = vld [vmem:[%s275 + $0x18] sm:$0xff]
      %v280 = vld [vmem:[%s275 + $0x20] sm:$0xff]
      %v281 = vld [vmem:[%s275 + $0x28] sm:$0xff]
      %v282 = vld [vmem:[%s275 + $0x30] sm:$0xf]
      %v283 = vadd.f32 %v267, %v276
      %v284 = vadd.f32 %v268, %v277
      %v285 = vadd.f32 %v269, %v278
      %v286 = vadd.f32 %v270, %v279
      %v287 = vadd.f32 %v271, %v280
      %v288 = vadd.f32 %v272, %v281
      %v289 = vadd.f32 %v273, %v282
      %s290 = sadd.s32 %s233, 4
      %s291 = scalar_lea.vmem [#allocation2], %s290
      %v292 = vld [vmem:[%s291] sm:$0xff]
      %v293 = vld [vmem:[%s291 + $0x8] sm:$0xff]
      %v294 = vld [vmem:[%s291 + $0x10] sm:$0xff]
      %v295 = vld [vmem:[%s291 + $0x18] sm:$0xff]
      %v296 = vld [vmem:[%s291 + $0x20] sm:$0xff]
      %v297 = vld [vmem:[%s291 + $0x28] sm:$0xff]
      %v298 = vld [vmem:[%s291 + $0x30] sm:$0xf]
      %v299 = vadd.f32 %v283, %v292
      %v300 = vadd.f32 %v284, %v293
      %v301 = vadd.f32 %v285, %v294
      %v302 = vadd.f32 %v286, %v295
      %v303 = vadd.f32 %v287, %v296
      %v304 = vadd.f32 %v288, %v297
      %v305 = vadd.f32 %v289, %v298
      %vm306 = vcmask 64512
      %307 = vst.msk [vmem:[#allocation3] sm:$0xff] %vm306, %v299
      %308 = vst.msk [vmem:[#allocation3 + $0x8] sm:$0xff] %vm306, %v300
      %309 = vst.msk [vmem:[#allocation3 + $0x10] sm:$0xff] %vm306, %v301
      %310 = vst.msk [vmem:[#allocation3 + $0x18] sm:$0xff] %vm306, %v302
      %311 = vst.msk [vmem:[#allocation3 + $0x20] sm:$0xff] %vm306, %v303
      %312 = vst.msk [vmem:[#allocation3 + $0x28] sm:$0xff] %vm306, %v304
      %vm313 = vcmask 60416
      %314 = vst.msk [vmem:[#allocation3 + $0x30] sm:$0xf] %vm313, %v305
      %v315 = vld [vmem:[#allocation3] sm:$0xff]
      %v316 = vld [vmem:[#allocation3 + $0x8] sm:$0xff]
      %v317 = vld [vmem:[#allocation3 + $0x10] sm:$0xff]
      %v318 = vld [vmem:[#allocation3 + $0x18] sm:$0xff]
      %v319 = vld [vmem:[#allocation3 + $0x5] sm:$0xff]
      %v320 = vld [vmem:[#allocation3 + $0xd] sm:$0xff]
      %v321 = vld [vmem:[#allocation3 + $0x15] sm:$0xff]
      %v322 = vld [vmem:[#allocation3 + $0x1d] sm:$0xff]
      %v323 = vadd.f32 %v315, %v319
      %v324 = vadd.f32 %v316, %v320
      %v325 = vadd.f32 %v317, %v321
      %v326 = vadd.f32 %v318, %v322
      %v327 = vld [vmem:[#allocation3 + $0xa] sm:$0xff]
      %v328 = vld [vmem:[#allocation3 + $0x12] sm:$0xff]
      %v329 = vld [vmem:[#allocation3 + $0x1a] sm:$0xff]
      %v330 = vld [vmem:[#allocation3 + $0x22] sm:$0xff]
      %v331 = vadd.f32 %v323, %v327
      %v332 = vadd.f32 %v324, %v328
      %v333 = vadd.f32 %v325, %v329
      %v334 = vadd.f32 %v326, %v330
      %v335 = vld [vmem:[#allocation3 + $0xf] sm:$0xff]
      %v336 = vld [vmem:[#allocation3 + $0x17] sm:$0xff]
      %v337 = vld [vmem:[#allocation3 + $0x1f] sm:$0xff]
      %v338 = vld [vmem:[#allocation3 + $0x27] sm:$0xff]
      %v339 = vadd.f32 %v331, %v335
      %v340 = vadd.f32 %v332, %v336
      %v341 = vadd.f32 %v333, %v337
      %v342 = vadd.f32 %v334, %v338
      %v343 = vld [vmem:[#allocation3 + $0x14] sm:$0xff]
      %v344 = vld [vmem:[#allocation3 + $0x1c] sm:$0xff]
      %v345 = vld [vmem:[#allocation3 + $0x24] sm:$0xff]
      %v346 = vld [vmem:[#allocation3 + $0x2c] sm:$0xff]
      %v347 = vadd.f32 %v339, %v343
      %v348 = vadd.f32 %v340, %v344
      %v349 = vadd.f32 %v341, %v345
      %v350 = vadd.f32 %v342, %v346
      %v351 = vmul.f32 %v347, 0.04
      %v352 = vmul.f32 %v348, 0.04
      %v353 = vmul.f32 %v349, 0.04
      %v354 = vmul.f32 %v350, 0.04
      %355 = vst.msk [vmem:[%s189] sm:$0xff] %vm306, %v351
      %356 = vst.msk [vmem:[%s189 + $0x8] sm:$0xff] %vm306, %v352
      %357 = vst.msk [vmem:[%s189 + $0x10] sm:$0xff] %vm306, %v353
      %358 = vst.msk [vmem:[%s189 + $0x18] sm:$0xff] %vm306, %v354
      %s359 = sadd.s32 %s233, 12
      %s360 = scalar_lea.vmem [#allocation2], %s359
      %v361 = vld [vmem:[%s360] sm:$0xff]
      %v362 = vld [vmem:[%s360 + $0x8] sm:$0xff]
      %v363 = vld [vmem:[%s360 + $0x10] sm:$0xff]
      %v364 = vld [vmem:[%s360 + $0x18] sm:$0xff]
      %v365 = vsub.f32 %v361, %v351
      %v366 = vsub.f32 %v362, %v352
      %v367 = vsub.f32 %v363, %v353
      %v368 = vsub.f32 %v364, %v354
      %369 = vst.msk [vmem:[%s179] sm:$0xff] %vm306, %v365
      %370 = vst.msk [vmem:[%s179 + $0x8] sm:$0xff] %vm306, %v366
      %371 = vst.msk [vmem:[%s179 + $0x10] sm:$0xff] %vm306, %v367
      %372 = vst.msk [vmem:[%s179 + $0x18] sm:$0xff] %vm306, %v368
      %s373 = smul.u32 4, %s19
      %p374 = scmp.lt.s32.totalorder %s18, 1
      %s375 = scalar_select %p374, %s18, 1
      %p376 = scmp.lt.s32.totalorder %s373, 11
      %s377 = scalar_select %p376, %s373, 11
      %s378 = smul.addr %s375, 12
      %s379 = sadd.s32 %s377, %s378
      %s380 = smul.addr %s379, 8
      %s381 = scalar_lea.vmem %s1, %s380
      %s382 = smul.u32 4, %s19
      %p383 = scmp.lt.s32.totalorder %s18, 1
      %s384 = scalar_select %p383, %s18, 1
      %p385 = scmp.lt.s32.totalorder %s382, 11
      %s386 = scalar_select %p385, %s382, 11
      %s387 = smul.addr %s384, 12
      %s388 = sadd.s32 %s386, %s387
      %s389 = smul.addr %s388, 8
      %s390 = scalar_lea.vmem %s2, %s389
      // Predicated region
      $region29: #{tpu_custom_call.1} parent=23 // pred_check
        %p391 = pneg %p72
      $region30: #{tpu_custom_call.1} parent=23 // pred_check_branch
        %393 = sbr.rel (%p391) target = $region32
      $region31: #{tpu_custom_call.1} parent=23 // pred_region
        %s394 = smul.u32 4, %s19
      $region32: #{tpu_custom_call.1} parent=23 // pred_fallthru
        _
      // Predicated region
      $region33: #{tpu_custom_call.1} parent=23 // pred_check
        %p395 = pneg %p100
      $region34: #{tpu_custom_call.1} parent=23 // pred_check_branch
        %397 = sbr.rel (%p395) target = $region36
      $region35: #{tpu_custom_call.1} parent=23 // pred_region
        %s398 = smul.u32 4, %s19
      $region36: #{tpu_custom_call.1} parent=23 // pred_fallthru
        _
    $region24: #{tpu_custom_call.1} parent=5 // pred_fallthru
      _
    %p399 = scmp.le.s32.totalorder 2, %s9
    // Predicated region
    $region37: #{tpu_custom_call.1} parent=5 // pred_check
      %p400 = pneg %p399
    $region38: #{tpu_custom_call.1} parent=5 // pred_check_branch
      %402 = sbr.rel (%p400) target = $region40
    $region39: #{tpu_custom_call.1} parent=5 // pred_region
      %s403 = ssub.s32 %s9, 2
      // Predicated region
      $region41: #{tpu_custom_call.1} parent=39 // pred_check
        %p404 = pneg %p78
      $region42: #{tpu_custom_call.1} parent=39 // pred_check_branch
        %406 = sbr.rel (%p404) target = $region44
      $region43: #{tpu_custom_call.1} parent=39 // pred_region
        %s407 = smul.u32 4, %s21
        %p408 = scmp.lt.s32.totalorder %s20, 1
        %s409 = scalar_select %p408, %s20, 1
        %p410 = scmp.lt.s32.totalorder %s407, 11
        %s411 = scalar_select %p410, %s407, 11
        %s412 = smul.addr %s409, 12
        %s413 = sadd.s32 %s411, %s412
        %s414 = smul.addr %s413, 8
        %s415 = scalar_lea.vmem %s1, %s414
      $region44: #{tpu_custom_call.1} parent=39 // pred_fallthru
        _
      // Predicated region
      $region45: #{tpu_custom_call.1} parent=39 // pred_check
        %p416 = pneg %p106
      $region46: #{tpu_custom_call.1} parent=39 // pred_check_branch
        %418 = sbr.rel (%p416) target = $region48
      $region47: #{tpu_custom_call.1} parent=39 // pred_region
        %s419 = smul.u32 4, %s21
        %p420 = scmp.lt.s32.totalorder %s20, 1
        %s421 = scalar_select %p420, %s20, 1
        %p422 = scmp.lt.s32.totalorder %s419, 11
        %s423 = scalar_select %p422, %s419, 11
        %s424 = smul.addr %s421, 12
        %s425 = sadd.s32 %s423, %s424
        %s426 = smul.addr %s425, 8
        %s427 = scalar_lea.vmem %s2, %s426
      $region48: #{tpu_custom_call.1} parent=39 // pred_fallthru
        _
    $region40: #{tpu_custom_call.1} parent=5 // pred_fallthru
      _
  $region6: #{tpu_custom_call.1} parent=0 // loop_footer
    %s13 = sadd.s32 1, %s9
  $region7: #{tpu_custom_call.1} parent=0 // loop_footer_branch
    %8 = sbr.rel target = $region3
  $region8: #{tpu_custom_call.1} parent=0 // loop_exit
    _

</llo_original>
